<compile_context>
chip_gen: v7x
topology: tpu7x:2x2x1
jax: 0.10.0
libtpu: 0.0.40
codegen_flags: <defaults>
</compile_context>

<pallas_src>
import functools

import jax
import jax.numpy as jnp
from jax.experimental import pallas as pl
from jax.experimental.pallas import tpu as pltpu


# ----------------------------------------------------------------------------
# Fused kernel: Conv1x1+BN+ReLU stack + mean-over-N / max-over-A pool + FC head
# ----------------------------------------------------------------------------
def _fused_kernel(*refs, n_mlp, n_fc, inv_n):
    # refs layout:
    #   [0] x        (1, C0, tile_na)        f32
    #   [1] sel      (tile_na, A)            bf16   (exact 0/1)
    #   [2 .. 2+2*n_mlp)   mlp  pairs: w bf16 (Cout,Cin), b f32 (Cout,1)
    #   [.. .. +2*n_fc)    fc   pairs: wT f32 (Cout,Cin), b f32 (Cout,1)
    #   [-3] feat    (1, C_last, tile_na)    bf16   output
    #   [-2] logits  (1, K, 1)               f32    output
    #   [-1] acc     (C_last, A)             f32    scratch
    x_ref, sel_ref = refs[0], refs[1]
    mlp_wb = refs[2:2 + 2 * n_mlp]
    fc_wb = refs[2 + 2 * n_mlp:2 + 2 * n_mlp + 2 * n_fc]
    feat_ref, logits_ref, acc_ref = refs[-3], refs[-2], refs[-1]

    t = pl.program_id(1)

    # Conv(1x1)+BN(folded)+ReLU stack; bf16 MXU operands, f32 accumulation,
    # bf16 carried activations.
    h = x_ref[0].astype(jnp.bfloat16)                  # (C0, tile_na)
    for l in range(n_mlp):
        w = mlp_wb[2 * l][...]                         # (Cout, Cin) bf16
        b = mlp_wb[2 * l + 1][...]                     # (Cout, 1)   f32
        y = jnp.dot(w, h, preferred_element_type=jnp.float32)
        h = jnp.maximum(y + b, 0.0).astype(jnp.bfloat16)

    c = h.shape[0]
    # Lane-dense bf16 out_feat store (NCHW layout, flattened spatial dims).
    feat_ref[...] = h.reshape(1, c, h.shape[1]).astype(feat_ref.dtype)

    # Running sum over points N, resolved per anchor via a bf16 selector matmul
    # (products are exact, accumulation is f32).
    @pl.when(t == 0)
    def _init():
        acc_ref[...] = jnp.zeros_like(acc_ref)

    acc_ref[...] += jnp.dot(h, sel_ref[...],
                            preferred_element_type=jnp.float32)   # (C, A) f32

    # Last tile: mean over N, max over anchors, then the whole FC head.
    @pl.when(t == pl.num_programs(1) - 1)
    def _finish():
        mean_ca = acc_ref[...] * inv_n                            # (C, A)
        z = jnp.max(mean_ca, axis=1, keepdims=True)               # (C, 1)
        for l in range(n_fc):
            wT = fc_wb[2 * l][...]                                # (Cout, Cin)
            b = fc_wb[2 * l + 1][...]                             # (Cout, 1)
            z = jnp.dot(wT, z, preferred_element_type=jnp.float32) + b
            if l < n_fc - 1:
                z = jnp.maximum(z, 0.0)
        k = z.shape[0]
        logits_ref[...] = z.reshape(1, k, 1).astype(logits_ref.dtype)


# ----------------------------------------------------------------------------
# Generation-aware VMEM budget + tile selection
# ----------------------------------------------------------------------------
def _vmem_limit_bytes():
    try:
        cap = int(pltpu.get_tpu_info().vmem_capacity_bytes)
    except Exception:
        cap = 64 * 1024 * 1024          # conservative default (v7x-sized)
    limit = min(cap * 3 // 4, cap - (8 << 20))
    return max(limit, 16 << 20)


def _pick_tile_n(n_points, n_anchors, est_bytes_fn, tile_budget, max_lanes=16384):
    """Largest divisor of N whose lane count is 128-aligned (or full) and whose
    estimated VMEM footprint fits the budget."""
    limit = max(1, min(n_points, max_lanes // max(n_anchors, 1)))
    for d in range(limit, 0, -1):
        if n_points % d:
            continue
        tna = d * n_anchors
        if (tna % 128 == 0 or d == n_points) and est_bytes_fn(tna) <= tile_budget:
            return d
    # Fallback: smallest aligned tile, ignoring the budget.
    for d in range(1, n_points + 1):
        if n_points % d == 0 and ((d * n_anchors) % 128 == 0 or d == n_points):
            return d
    return n_points


# ----------------------------------------------------------------------------
# Wrapper
# ----------------------------------------------------------------------------
def cls_outblock_pallas(x_nchw, mlp_params, fc1_params, fc2_params, bn_eps=1e-5):
    """x: (B, C0, N, A) -> logits (B, k), out_feat (B, C_last, N, A) bf16."""
    B, C0, N, A = x_nchw.shape
    NA = N * A

    # Fold eval-mode BN into the conv weight/bias; transpose for NCHW matmul.
    ws, bs = [], []
    c_last = C0
    for (w, conv_b, gamma, beta, rmean, rvar) in mlp_params:
        scale = gamma / jnp.sqrt(rvar + bn_eps)
        shift = beta + scale * (conv_b - rmean)
        ws.append((w * scale[None, :]).T.astype(jnp.bfloat16))    # (Cout, Cin)
        bs.append(shift.reshape(-1, 1).astype(jnp.float32))       # (Cout, 1)
        c_last = w.shape[1]
    n_mlp = len(ws)
    channels = [w.shape[0] for w in ws]

    # FC head weights, transposed so the epilogue works on column vectors
    # (no in-kernel layout flips).
    fc_ws, fc_bs = [], []
    for (w, b) in list(fc1_params) + [fc2_params]:
        fc_ws.append(w.T.astype(jnp.float32))                     # (Cout, Cin)
        fc_bs.append(b.reshape(-1, 1).astype(jnp.float32))        # (Cout, 1)
    n_fc = len(fc_ws)
    k_out = fc_ws[-1].shape[0]

    weight_bytes = (sum(int(w.size) * 2 + int(b.size) * 4 for w, b in zip(ws, bs))
                    + sum(int(w.size) * 4 + int(b.size) * 4
                          for w, b in zip(fc_ws, fc_bs)))

    def est_bytes(tile_na):
        by = 2 * C0 * tile_na * 4                       # double-buffered f32 input
        by += 2 * c_last * tile_na * 2                  # double-buffered bf16 feat out
        by += sum(cc * tile_na * 6 for cc in channels)  # f32 dot result + bf16 act
        by += 2 * tile_na * A * 2                       # selector (bf16, 2 bufs)
        by += 2 * weight_bytes                          # weights/biases (2 bufs)
        by += c_last * A * 4 + 2 * k_out * 4            # acc scratch + logits block
        return by

    vmem_limit = _vmem_limit_bytes()
    tile_n = _pick_tile_n(N, A, est_bytes, int(vmem_limit * 0.7))
    tile_na = tile_n * A
    nt = NA // tile_na

    # sel[r, a] = 1 if (r mod A) == a : sums over points, resolved per anchor.
    sel = (jnp.arange(tile_na)[:, None] % A ==
           jnp.arange(A)[None, :]).astype(jnp.bfloat16)

    x_flat = x_nchw.reshape(B, C0, NA)

    # Advisory cost estimate.
    flops = 0
    cin = C0
    for cout in channels:
        flops += 2 * B * NA * cin * cout
        cin = cout
    flops += 2 * B * NA * c_last * A
    cin = c_last
    for w in fc_ws:
        flops += 2 * B * cin * w.shape[0]
        cin = w.shape[0]
    bytes_accessed = (B * C0 * NA * 4 + B * c_last * NA * 2 + B * k_out * 4
                      + weight_bytes + tile_na * A * 2)

    in_specs = [
        pl.BlockSpec((1, C0, tile_na), lambda b, t: (b, 0, t)),
        pl.BlockSpec((tile_na, A), lambda b, t: (0, 0)),
    ]
    operands = [x_flat, sel]
    for w, bias in zip(ws, bs):
        in_specs.append(pl.BlockSpec(w.shape, lambda b, t: (0, 0)))
        in_specs.append(pl.BlockSpec(bias.shape, lambda b, t: (0, 0)))
        operands += [w, bias]
    for w, bias in zip(fc_ws, fc_bs):
        in_specs.append(pl.BlockSpec(w.shape, lambda b, t: (0, 0)))
        in_specs.append(pl.BlockSpec(bias.shape, lambda b, t: (0, 0)))
        operands += [w, bias]

    kern = functools.partial(_fused_kernel, n_mlp=n_mlp, n_fc=n_fc, inv_n=1.0 / N)

    feat_flat, logits_col = pl.pallas_call(
        kern,
        out_shape=(jax.ShapeDtypeStruct((B, c_last, NA), jnp.bfloat16),
                   jax.ShapeDtypeStruct((B, k_out, 1), jnp.float32)),
        grid=(B, nt),
        in_specs=in_specs,
        out_specs=(pl.BlockSpec((1, c_last, tile_na), lambda b, t: (b, 0, t)),
                   pl.BlockSpec((1, k_out, 1), lambda b, t: (b, 0, 0))),
        scratch_shapes=[pltpu.VMEM((c_last, A), jnp.float32)],
        compiler_params=pltpu.CompilerParams(
            dimension_semantics=("parallel", "arbitrary"),
            vmem_limit_bytes=int(vmem_limit)),
        cost_estimate=pl.CostEstimate(flops=flops, transcendentals=0,
                                      bytes_accessed=bytes_accessed),
    )(*operands)

    out_feat = feat_flat.reshape(B, c_last, N, A)
    logits = logits_col.reshape(B, k_out)
    return logits, out_feat


def cls_out_block_forward(feats_nchw, params):
    """feats: (B, C_in, N, A) f32 -> (logits (B, k), out_feat.squeeze())."""
    logits, out_feat = cls_outblock_pallas(
        feats_nchw, params["mlp"], params["fc1"], params["fc2"])
    return logits, jnp.squeeze(out_feat)


# ----------------------------------------------------------------------------
# Parameter construction (deterministic, synthetic)
# ----------------------------------------------------------------------------
def init_params(key, c_in, mlp, fc, k):
    params = {"mlp": [], "fc1": []}
    for c in mlp:
        key, k1, k2, k3, k4, k5, k6 = jax.random.split(key, 7)
        w = jax.random.normal(k1, (c_in, c), jnp.float32) * 0.1       # conv weight
        b = jax.random.normal(k2, (c,), jnp.float32) * 0.1            # conv bias
        gamma = 1.0 + 0.1 * jax.random.normal(k3, (c,), jnp.float32)  # BN weight
        beta = 0.1 * jax.random.normal(k4, (c,), jnp.float32)         # BN bias
        rmean = 0.1 * jax.random.normal(k5, (c,), jnp.float32)        # BN run_mean
        rvar = 1.0 + 0.1 * jax.random.uniform(k6, (c,), jnp.float32)  # BN run_var
        params["mlp"].append((w, b, gamma, beta, rmean, rvar))
        c_in = c
    for c in fc:
        key, k1, k2 = jax.random.split(key, 3)
        params["fc1"].append((jax.random.normal(k1, (c_in, c), jnp.float32) * 0.1,
                              jax.random.normal(k2, (c,), jnp.float32) * 0.1))
        c_in = c
    key, k1, k2 = jax.random.split(key, 3)
    params["fc2"] = (jax.random.normal(k1, (c_in, k), jnp.float32) * 0.1,
                     jax.random.normal(k2, (k,), jnp.float32) * 0.1)
    return params


# ----------------------------------------------------------------------------
# Pure-JAX reference (for verification)
# ----------------------------------------------------------------------------
def reference_forward(feats, params, bn_eps=1e-5):
    x = feats
    for (w, conv_b, gamma, beta, rmean, rvar) in params["mlp"]:
        z = jnp.einsum("bcna,cd->bdna", x, w) + conv_b[None, :, None, None]
        scale = gamma / jnp.sqrt(rvar + bn_eps)
        z = z * scale[None, :, None, None] + (beta - scale * rmean)[None, :, None, None]
        x = jnp.maximum(z, 0.0)
    out_feat = x
    y = x.mean(axis=2).max(axis=-1)
    for (w, b) in params["fc1"]:
        y = jnp.maximum(y @ w + b, 0.0)
    w2, b2 = params["fc2"]
    return y @ w2 + b2, out_feat


if __name__ == "__main__":
    B, C_IN, N, A = 2, 4, 16, 8          # batch, channels, points, anchors
    MLP, FC, K = [32, 32], [32], 10

    key = jax.random.PRNGKey(0)
    key, kx, kp = jax.random.split(key, 3)
    feats = jax.random.normal(kx, (B, C_IN, N, A), jnp.float32)
    params = init_params(kp, C_IN, MLP, FC, K)

    logits, out_feat = cls_out_block_forward(feats, params)
    logits = jax.block_until_ready(logits)
    out_feat = jax.block_until_ready(out_feat)

    assert logits.shape == (B, K), logits.shape
    assert out_feat.shape == (B, MLP[-1], N, A), out_feat.shape

    ref_logits, ref_feat = reference_forward(feats, params)
    assert jnp.allclose(out_feat.astype(jnp.float32), ref_feat,
                        atol=5e-2, rtol=5e-2)
    assert jnp.allclose(logits, ref_logits, atol=5e-2, rtol=5e-2)

    print("KERNEL_OK")
</pallas_src>

<mosaic_0001>
module attributes {stable_mosaic.version = 11 : i64} {
  func.func @_fused_kernel(%arg0: i32, %arg1: i32, %arg2: memref<1x4x128xf32, #tpu.memory_space<vmem>>, %arg3: memref<128x8xbf16, #tpu.memory_space<vmem>>, %arg4: memref<32x4xbf16, #tpu.memory_space<vmem>>, %arg5: memref<32x1xf32, #tpu.memory_space<vmem>>, %arg6: memref<32x32xbf16, #tpu.memory_space<vmem>>, %arg7: memref<32x1xf32, #tpu.memory_space<vmem>>, %arg8: memref<32x32xf32, #tpu.memory_space<vmem>>, %arg9: memref<32x1xf32, #tpu.memory_space<vmem>>, %arg10: memref<10x32xf32, #tpu.memory_space<vmem>>, %arg11: memref<10x1xf32, #tpu.memory_space<vmem>>, %arg12: memref<1x32x128xbf16, #tpu.memory_space<vmem>>, %arg13: memref<1x10x1xf32, #tpu.memory_space<vmem>>, %arg14: memref<32x8xf32, #tpu.memory_space<vmem>>) attributes {dimension_semantics = [#tpu.dimension_semantics<parallel>, #tpu.dimension_semantics<arbitrary>], iteration_bounds = array<i64: 2, 1>, scalar_prefetch = 0 : i64, scratch_operands = 1 : i64, tpu.core_type = #tpu.core_type<tc>, window_params = [{transform_indices = @transform_0, window_bounds = array<i64: 1, 4, 128>}, {pipeline_mode = #tpu.pipeline_mode<synchronous>, transform_indices = @transform_1, window_bounds = array<i64: 128, 8>}, {pipeline_mode = #tpu.pipeline_mode<synchronous>, transform_indices = @transform_2, window_bounds = array<i64: 32, 4>}, {pipeline_mode = #tpu.pipeline_mode<synchronous>, transform_indices = @transform_3, window_bounds = array<i64: 32, 1>}, {pipeline_mode = #tpu.pipeline_mode<synchronous>, transform_indices = @transform_4, window_bounds = array<i64: 32, 32>}, {pipeline_mode = #tpu.pipeline_mode<synchronous>, transform_indices = @transform_5, window_bounds = array<i64: 32, 1>}, {pipeline_mode = #tpu.pipeline_mode<synchronous>, transform_indices = @transform_6, window_bounds = array<i64: 32, 32>}, {pipeline_mode = #tpu.pipeline_mode<synchronous>, transform_indices = @transform_7, window_bounds = array<i64: 32, 1>}, {pipeline_mode = #tpu.pipeline_mode<synchronous>, transform_indices = @transform_8, window_bounds = array<i64: 10, 32>}, {pipeline_mode = #tpu.pipeline_mode<synchronous>, transform_indices = @transform_9, window_bounds = array<i64: 10, 1>}, {transform_indices = @transform_10, window_bounds = array<i64: 1, 32, 128>}, {transform_indices = @transform_11, window_bounds = array<i64: 1, 10, 1>}]} {
    %c0 = arith.constant 0 : index
    %c0_0 = arith.constant 0 : index
    %c0_1 = arith.constant 0 : index
    %0 = vector.load %arg2[%c0, %c0_0, %c0_1] : memref<1x4x128xf32, #tpu.memory_space<vmem>>, vector<1x4x128xf32>
    %1 = vector.shape_cast %0 : vector<1x4x128xf32> to vector<4x128xf32>
    %2 = arith.truncf %1 : vector<4x128xf32> to vector<4x128xbf16>
    %c0_2 = arith.constant 0 : index
    %c0_3 = arith.constant 0 : index
    %3 = vector.load %arg4[%c0_2, %c0_3] : memref<32x4xbf16, #tpu.memory_space<vmem>>, vector<32x4xbf16>
    %c0_4 = arith.constant 0 : index
    %c0_5 = arith.constant 0 : index
    %4 = vector.load %arg5[%c0_4, %c0_5] : memref<32x1xf32, #tpu.memory_space<vmem>>, vector<32x1xf32>
    %cst = arith.constant dense<0.000000e+00> : vector<32x128xf32>
    %5 = tpu.matmul %3, %2, %cst {dimension_numbers = #tpu.dot_dimension_numbers<[1], [0], [0], [1], [0, 0, 1, 1], [], []>} : vector<32x4xbf16>, vector<4x128xbf16>, vector<32x128xf32> -> vector<32x128xf32>
    %6 = vector.broadcast %4 : vector<32x1xf32> to vector<32x128xf32>
    %7 = arith.addf %5, %6 : vector<32x128xf32>
    %cst_6 = arith.constant 0.000000e+00 : f32
    %8 = vector.broadcast %cst_6 : f32 to vector<32x128xf32>
    %9 = arith.maximumf %7, %8 : vector<32x128xf32>
    %10 = arith.truncf %9 : vector<32x128xf32> to vector<32x128xbf16>
    %c0_7 = arith.constant 0 : index
    %c0_8 = arith.constant 0 : index
    %11 = vector.load %arg6[%c0_7, %c0_8] : memref<32x32xbf16, #tpu.memory_space<vmem>>, vector<32x32xbf16>
    %c0_9 = arith.constant 0 : index
    %c0_10 = arith.constant 0 : index
    %12 = vector.load %arg7[%c0_9, %c0_10] : memref<32x1xf32, #tpu.memory_space<vmem>>, vector<32x1xf32>
    %cst_11 = arith.constant dense<0.000000e+00> : vector<32x128xf32>
    %13 = tpu.matmul %11, %10, %cst_11 {dimension_numbers = #tpu.dot_dimension_numbers<[1], [0], [0], [1], [0, 0, 1, 1], [], []>} : vector<32x32xbf16>, vector<32x128xbf16>, vector<32x128xf32> -> vector<32x128xf32>
    %14 = vector.broadcast %12 : vector<32x1xf32> to vector<32x128xf32>
    %15 = arith.addf %13, %14 : vector<32x128xf32>
    %cst_12 = arith.constant 0.000000e+00 : f32
    %16 = vector.broadcast %cst_12 : f32 to vector<32x128xf32>
    %17 = arith.maximumf %15, %16 : vector<32x128xf32>
    %18 = arith.truncf %17 : vector<32x128xf32> to vector<32x128xbf16>
    %19 = vector.shape_cast %18 : vector<32x128xbf16> to vector<1x32x128xbf16>
    %c0_13 = arith.constant 0 : index
    %c0_14 = arith.constant 0 : index
    %c0_15 = arith.constant 0 : index
    %20 = vector.load %arg12[%c0_13, %c0_14, %c0_15] : memref<1x32x128xbf16, #tpu.memory_space<vmem>>, vector<1x32x128xbf16>
    tpu.vector_store %arg12[%c0_13, %c0_14, %c0_15], %19 {strides = array<i32>} : memref<1x32x128xbf16, #tpu.memory_space<vmem>>, vector<1x32x128xbf16>,
    %c0_i32 = arith.constant 0 : i32
    %21 = arith.cmpi eq, %arg1, %c0_i32 : i32
    %22 = arith.extui %21 : i1 to i32
    %c0_i32_16 = arith.constant 0 : i32
    %23 = arith.cmpi ne, %22, %c0_i32_16 : i32
    scf.if %23 {
      %cst_26 = arith.constant 0.000000e+00 : f32
      %32 = vector.broadcast %cst_26 : f32 to vector<32x8xf32>
      %c0_27 = arith.constant 0 : index
      %c0_28 = arith.constant 0 : index
      %33 = vector.load %arg14[%c0_27, %c0_28] : memref<32x8xf32, #tpu.memory_space<vmem>>, vector<32x8xf32>
      tpu.vector_store %arg14[%c0_27, %c0_28], %32 {strides = array<i32>} : memref<32x8xf32, #tpu.memory_space<vmem>>, vector<32x8xf32>,
    } else {
    }
    %c0_17 = arith.constant 0 : index
    %c0_18 = arith.constant 0 : index
    %24 = vector.load %arg14[%c0_17, %c0_18] : memref<32x8xf32, #tpu.memory_space<vmem>>, vector<32x8xf32>
    %c0_19 = arith.constant 0 : index
    %c0_20 = arith.constant 0 : index
    %25 = vector.load %arg3[%c0_19, %c0_20] : memref<128x8xbf16, #tpu.memory_space<vmem>>, vector<128x8xbf16>
    %cst_21 = arith.constant dense<0.000000e+00> : vector<32x8xf32>
    %26 = tpu.matmul %18, %25, %cst_21 {dimension_numbers = #tpu.dot_dimension_numbers<[1], [0], [0], [1], [0, 0, 1, 1], [], []>} : vector<32x128xbf16>, vector<128x8xbf16>, vector<32x8xf32> -> vector<32x8xf32>
    %27 = arith.addf %24, %26 : vector<32x8xf32>
    %c0_22 = arith.constant 0 : index
    %c0_23 = arith.constant 0 : index
    %28 = vector.load %arg14[%c0_22, %c0_23] : memref<32x8xf32, #tpu.memory_space<vmem>>, vector<32x8xf32>
    tpu.vector_store %arg14[%c0_22, %c0_23], %27 {strides = array<i32>} : memref<32x8xf32, #tpu.memory_space<vmem>>, vector<32x8xf32>,
    %c0_i32_24 = arith.constant 0 : i32
    %29 = arith.cmpi eq, %arg1, %c0_i32_24 : i32
    %30 = arith.extui %29 : i1 to i32
    %c0_i32_25 = arith.constant 0 : i32
    %31 = arith.cmpi ne, %30, %c0_i32_25 : i32
    scf.if %31 {
      %c0_26 = arith.constant 0 : index
      %c0_27 = arith.constant 0 : index
      %32 = vector.load %arg14[%c0_26, %c0_27] : memref<32x8xf32, #tpu.memory_space<vmem>>, vector<32x8xf32>
      %cst_28 = arith.constant 6.250000e-02 : f32
      %33 = vector.broadcast %cst_28 : f32 to vector<32x8xf32>
      %34 = arith.mulf %32, %33 : vector<32x8xf32>
      %cst_29 = arith.constant dense<0xFF800000> : vector<32xf32>
      %35 = vector.multi_reduction <maximumf>, %34, %cst_29 [1] : vector<32x8xf32> to vector<32xf32>
      %36 = vector.shape_cast %35 : vector<32xf32> to vector<32x1xf32>
      %c0_30 = arith.constant 0 : index
      %c0_31 = arith.constant 0 : index
      %37 = vector.load %arg8[%c0_30, %c0_31] : memref<32x32xf32, #tpu.memory_space<vmem>>, vector<32x32xf32>
      %c0_32 = arith.constant 0 : index
      %c0_33 = arith.constant 0 : index
      %38 = vector.load %arg9[%c0_32, %c0_33] : memref<32x1xf32, #tpu.memory_space<vmem>>, vector<32x1xf32>
      %cst_34 = arith.constant dense<0.000000e+00> : vector<32x1xf32>
      %39 = tpu.matmul %37, %36, %cst_34 {dimension_numbers = #tpu.dot_dimension_numbers<[1], [0], [0], [1], [0, 0, 1, 1], [], []>} : vector<32x32xf32>, vector<32x1xf32>, vector<32x1xf32> -> vector<32x1xf32>
      %40 = arith.addf %39, %38 : vector<32x1xf32>
      %cst_35 = arith.constant 0.000000e+00 : f32
      %41 = vector.broadcast %cst_35 : f32 to vector<32x1xf32>
      %42 = arith.maximumf %40, %41 : vector<32x1xf32>
      %c0_36 = arith.constant 0 : index
      %c0_37 = arith.constant 0 : index
      %43 = vector.load %arg10[%c0_36, %c0_37] : memref<10x32xf32, #tpu.memory_space<vmem>>, vector<10x32xf32>
      %c0_38 = arith.constant 0 : index
      %c0_39 = arith.constant 0 : index
      %44 = vector.load %arg11[%c0_38, %c0_39] : memref<10x1xf32, #tpu.memory_space<vmem>>, vector<10x1xf32>
      %cst_40 = arith.constant dense<0.000000e+00> : vector<10x1xf32>
      %45 = tpu.matmul %43, %42, %cst_40 {dimension_numbers = #tpu.dot_dimension_numbers<[1], [0], [0], [1], [0, 0, 1, 1], [], []>} : vector<10x32xf32>, vector<32x1xf32>, vector<10x1xf32> -> vector<10x1xf32>
      %46 = arith.addf %45, %44 : vector<10x1xf32>
      %47 = vector.shape_cast %46 : vector<10x1xf32> to vector<1x10x1xf32>
      %c0_41 = arith.constant 0 : index
      %c0_42 = arith.constant 0 : index
      %c0_43 = arith.constant 0 : index
      %48 = vector.load %arg13[%c0_41, %c0_42, %c0_43] : memref<1x10x1xf32, #tpu.memory_space<vmem>>, vector<1x10x1xf32>
      tpu.vector_store %arg13[%c0_41, %c0_42, %c0_43], %47 {strides = array<i32>} : memref<1x10x1xf32, #tpu.memory_space<vmem>>, vector<1x10x1xf32>,
    } else {
    }
    return
  }
  func.func @transform_0(%arg0: i32, %arg1: i32) -> (i32, i32, i32) {
    %c0_i32 = arith.constant 0 : i32
    %c0_i32_0 = arith.constant 0 : i32
    return %arg0, %c0_i32, %arg1 : i32, i32, i32
  }
  func.func @transform_1(%arg0: i32, %arg1: i32) -> (i32, i32) {
    %c0_i32 = arith.constant 0 : i32
    %c0_i32_0 = arith.constant 0 : i32
    %c0_i32_1 = arith.constant 0 : i32
    return %c0_i32, %c0_i32_0 : i32, i32
  }
  func.func @transform_2(%arg0: i32, %arg1: i32) -> (i32, i32) {
    %c0_i32 = arith.constant 0 : i32
    %c0_i32_0 = arith.constant 0 : i32
    %c0_i32_1 = arith.constant 0 : i32
    return %c0_i32, %c0_i32_0 : i32, i32
  }
  func.func @transform_3(%arg0: i32, %arg1: i32) -> (i32, i32) {
    %c0_i32 = arith.constant 0 : i32
    %c0_i32_0 = arith.constant 0 : i32
    %c0_i32_1 = arith.constant 0 : i32
    return %c0_i32, %c0_i32_0 : i32, i32
  }
  func.func @transform_4(%arg0: i32, %arg1: i32) -> (i32, i32) {
    %c0_i32 = arith.constant 0 : i32
    %c0_i32_0 = arith.constant 0 : i32
    %c0_i32_1 = arith.constant 0 : i32
    return %c0_i32, %c0_i32_0 : i32, i32
  }
  func.func @transform_5(%arg0: i32, %arg1: i32) -> (i32, i32) {
    %c0_i32 = arith.constant 0 : i32
    %c0_i32_0 = arith.constant 0 : i32
    %c0_i32_1 = arith.constant 0 : i32
    return %c0_i32, %c0_i32_0 : i32, i32
  }
  func.func @transform_6(%arg0: i32, %arg1: i32) -> (i32, i32) {
    %c0_i32 = arith.constant 0 : i32
    %c0_i32_0 = arith.constant 0 : i32
    %c0_i32_1 = arith.constant 0 : i32
    return %c0_i32, %c0_i32_0 : i32, i32
  }
  func.func @transform_7(%arg0: i32, %arg1: i32) -> (i32, i32) {
    %c0_i32 = arith.constant 0 : i32
    %c0_i32_0 = arith.constant 0 : i32
    %c0_i32_1 = arith.constant 0 : i32
    return %c0_i32, %c0_i32_0 : i32, i32
  }
  func.func @transform_8(%arg0: i32, %arg1: i32) -> (i32, i32) {
    %c0_i32 = arith.constant 0 : i32
    %c0_i32_0 = arith.constant 0 : i32
    %c0_i32_1 = arith.constant 0 : i32
    return %c0_i32, %c0_i32_0 : i32, i32
  }
  func.func @transform_9(%arg0: i32, %arg1: i32) -> (i32, i32) {
    %c0_i32 = arith.constant 0 : i32
    %c0_i32_0 = arith.constant 0 : i32
    %c0_i32_1 = arith.constant 0 : i32
    return %c0_i32, %c0_i32_0 : i32, i32
  }
  func.func @transform_10(%arg0: i32, %arg1: i32) -> (i32, i32, i32) {
    %c0_i32 = arith.constant 0 : i32
    %c0_i32_0 = arith.constant 0 : i32
    return %arg0, %c0_i32, %arg1 : i32, i32, i32
  }
  func.func @transform_11(%arg0: i32, %arg1: i32) -> (i32, i32, i32) {
    %c0_i32 = arith.constant 0 : i32
    %c0_i32_0 = arith.constant 0 : i32
    %c0_i32_1 = arith.constant 0 : i32
    return %arg0, %c0_i32, %c0_i32_0 : i32, i32, i32
  }
}

</mosaic_0001>

<llo_original>
// kernel: tpu_custom_call.1
$region0: #{tpu_custom_call.1}
  #allocation0 [shape = 'u32[]', space=smem, size = 0x4, offset = 0x4, fixed_abs, tag = 'smem constant byte address 0x4 - core index']
  #allocation1 [shape = 'u32[144,128]{1,0:T(1,128)}', space=vmem, size = 0x12000, scoped, tag = 'internal scratch']
  #allocation2 [shape = 'f32[32,8]{1,0:T(8,128)}', space=vmem, size = 0x4000, scoped, tag = 'scratch operand']
  %s0 = inlined_call_operand.vmem [shape: f32[2,4,128], index: 0, kind: input, shape index: {}]
  %s1 = inlined_call_operand.vmem [shape: bf16[128,8], index: 1, kind: input, shape index: {}]
  %s2 = inlined_call_operand.vmem [shape: bf16[32,4], index: 2, kind: input, shape index: {}]
  %s3 = inlined_call_operand.vmem [shape: f32[32,1], index: 3, kind: input, shape index: {}]
  %s4 = inlined_call_operand.vmem [shape: bf16[32,32], index: 4, kind: input, shape index: {}]
  %s5 = inlined_call_operand.vmem [shape: f32[32,1], index: 5, kind: input, shape index: {}]
  %s6 = inlined_call_operand.vmem [shape: f32[32,32], index: 6, kind: input, shape index: {}]
  %s7 = inlined_call_operand.vmem [shape: f32[32,1], index: 7, kind: input, shape index: {}]
  %s8 = inlined_call_operand.vmem [shape: f32[10,32], index: 8, kind: input, shape index: {}]
  %s9 = inlined_call_operand.vmem [shape: f32[10,1], index: 9, kind: input, shape index: {}]
  %s10 = inlined_call_operand.hbm [shape: bf16[2,32,128], index: 10, kind: output, shape index: {0}]
  %s11 = inlined_call_operand.vmem [shape: f32[2,10,1], index: 11, kind: output, shape index: {1}]
  %12 = xla_tuple %s10, %s11
  %s13 = sld [smem:[#allocation0]]
  $region89: #{tpu_custom_call.1} parent=0
    _
  %s15 = ssub.s32 1, %s13
  %s16 = scalar_select 0, %s15, %s13
  $region1: #{tpu_custom_call.1} parent=0
    #allocation3 [shape = 'u8[16384]{0}', space=vmem, size = 0x4000, scoped, tag = 'output window, operand 0']
    #allocation4 [shape = 's32[2]{0}', space=sflag, size = 0x8, scoped, tag = 'scoped memory for tpu_custom_call.1']
    %17 = vsyncpa [#allocation4], 0
    %s18 = scalar_lea.sflag [#allocation4], 1
    %19 = vsyncpa %s18, 0
    loop: start=0, step=1, limit=4
    $region2: #{tpu_custom_call.1} parent=1 // loop_pre_header
      _
    $region3: #{tpu_custom_call.1} parent=1 // loop_header
      %s21 = sphi 0, %s25
      %p22 = scmp.ge.s32.totalorder %s21, 4
      %s28 = sphi 0, %s40
      %s29 = sphi 0, %s36
      %s30 = sphi 0, %s28
      %s31 = sphi 0, %s29
      %s32 = sphi 0, %s30
      %s33 = sphi 0, %s31
      %s45 = sphi 0, %s47
      %s48 = sphi 0, %s45
      %s49 = sphi 0, %s48
      %s65 = sphi 0, %s49
      %s69 = sphi 0, %s69
      %s71 = sphi 0, %s69
      %s72 = sphi 0, %s71
      %s86 = sphi 0, %s72
      %s90 = sphi 0, %s90
      %s92 = sphi 0, %s90
      %s93 = sphi 0, %s92
      %s107 = sphi 0, %s93
      %s111 = sphi 0, %s111
      %s113 = sphi 0, %s111
      %s114 = sphi 0, %s113
      %s128 = sphi 0, %s114
      %s132 = sphi 0, %s132
      %s134 = sphi 0, %s132
      %s135 = sphi 0, %s134
      %s149 = sphi 0, %s135
      %s153 = sphi 0, %s153
      %s155 = sphi 0, %s153
      %s156 = sphi 0, %s155
      %s170 = sphi 0, %s156
      %s174 = sphi 0, %s174
      %s176 = sphi 0, %s174
      %s177 = sphi 0, %s176
      %s191 = sphi 0, %s177
      %s195 = sphi 0, %s195
      %s197 = sphi 0, %s195
      %s198 = sphi 0, %s197
      %s212 = sphi 0, %s198
      %s216 = sphi 0, %s216
      %s218 = sphi 0, %s216
      %s219 = sphi 0, %s218
      %s233 = sphi 0, %s219
      %s237 = sphi 0, %s237
      %s239 = sphi 0, %s237
      %s240 = sphi 0, %s239
      %s254 = sphi 0, %s240
      %s262 = sphi 0, %s264
      %s265 = sphi 0, %s262
      %s266 = sphi 0, %s265
      %s282 = sphi 0, %s266
      %s288 = sphi 0, %s290
      %s291 = sphi 0, %s288
      %s292 = sphi 0, %s291
      %s308 = sphi 0, %s292
    $region4: #{tpu_custom_call.1} parent=1 // loop_header_branch
      %24 = sbr.rel (%p22) target = $region8
    $region5: #{tpu_custom_call.1} parent=1 // loop_body
      %s26 = ssub.s32 %s21, 1
      %s27 = ssub.s32 %s21, 2
      %s34 = sadd.s32 1, %s29
      %p35 = scmp.ge.s32.totalorder %s34, 1
      %s36 = scalar_select %p35, 0, %s34
      %s37 = sadd.s32 1, %s28
      %s38 = scalar_select %p35, %s37, %s28
      %p39 = scmp.ge.s32.totalorder %s38, 2
      %s40 = scalar_select %p39, 0, %s38
      %s41 = ssub.s32 %s28, %s40
      %s42 = ssub.s32 %s29, %s36
      %s43 = sor.u32 %s41, %s42
      %p44 = scmp.eq.s32.totalorder %s43, 0
      %s46 = sadd.s32 %s45, 1
      %s47 = scalar_select %p44, %s45, %s46
      %p50 = pneg %p44
      %p51 = scmp.eq.s32.totalorder %s21, 1
      %p52 = por %p50, %p51
      %p53 = scmp.ne.s32.totalorder %s45, %s48
      %p54 = scmp.eq.s32.totalorder %s21, 0
      %p55 = por %p53, %p54
      %p56 = scmp.ne.s32.totalorder %s45, %s48
      %p57 = scmp.eq.s32.totalorder %s26, 1
      %p58 = por %p56, %p57
      %p59 = scmp.ne.s32.totalorder %s48, %s49
      %p60 = scmp.eq.s32.totalorder %s26, 0
      %p61 = por %p59, %p60
      %p62 = scmp.ne.s32.totalorder %s48, %s49
      %p63 = scmp.eq.s32.totalorder %s27, 1
      %p64 = por %p62, %p63
      %p66 = scmp.ne.s32.totalorder %s49, %s65
      %p67 = scmp.eq.s32.totalorder %s27, 0
      %p68 = por %p66, %p67
      %s70 = sadd.s32 %s69, 1
      %p73 = scmp.eq.s32.totalorder %s21, 1
      %p74 = scmp.ne.s32.totalorder %s69, %s71
      %p75 = scmp.eq.s32.totalorder %s21, 0
      %p76 = por %p74, %p75
      %p77 = scmp.ne.s32.totalorder %s69, %s71
      %p78 = scmp.eq.s32.totalorder %s26, 1
      %p79 = por %p77, %p78
      %p80 = scmp.ne.s32.totalorder %s71, %s72
      %p81 = scmp.eq.s32.totalorder %s26, 0
      %p82 = por %p80, %p81
      %p83 = scmp.ne.s32.totalorder %s71, %s72
      %p84 = scmp.eq.s32.totalorder %s27, 1
      %p85 = por %p83, %p84
      %p87 = scmp.ne.s32.totalorder %s72, %s86
      %p88 = scmp.eq.s32.totalorder %s27, 0
      %p89 = por %p87, %p88
      %s91 = sadd.s32 %s90, 1
      %p94 = scmp.eq.s32.totalorder %s21, 1
      %p95 = scmp.ne.s32.totalorder %s90, %s92
      %p96 = scmp.eq.s32.totalorder %s21, 0
      %p97 = por %p95, %p96
      %p98 = scmp.ne.s32.totalorder %s90, %s92
      %p99 = scmp.eq.s32.totalorder %s26, 1
      %p100 = por %p98, %p99
      %p101 = scmp.ne.s32.totalorder %s92, %s93
      %p102 = scmp.eq.s32.totalorder %s26, 0
      %p103 = por %p101, %p102
      %p104 = scmp.ne.s32.totalorder %s92, %s93
      %p105 = scmp.eq.s32.totalorder %s27, 1
      %p106 = por %p104, %p105
      %p108 = scmp.ne.s32.totalorder %s93, %s107
      %p109 = scmp.eq.s32.totalorder %s27, 0
      %p110 = por %p108, %p109
      %s112 = sadd.s32 %s111, 1
      %p115 = scmp.eq.s32.totalorder %s21, 1
      %p116 = scmp.ne.s32.totalorder %s111, %s113
      %p117 = scmp.eq.s32.totalorder %s21, 0
      %p118 = por %p116, %p117
      %p119 = scmp.ne.s32.totalorder %s111, %s113
      %p120 = scmp.eq.s32.totalorder %s26, 1
      %p121 = por %p119, %p120
      %p122 = scmp.ne.s32.totalorder %s113, %s114
      %p123 = scmp.eq.s32.totalorder %s26, 0
      %p124 = por %p122, %p123
      %p125 = scmp.ne.s32.totalorder %s113, %s114
      %p126 = scmp.eq.s32.totalorder %s27, 1
      %p127 = por %p125, %p126
      %p129 = scmp.ne.s32.totalorder %s114, %s128
      %p130 = scmp.eq.s32.totalorder %s27, 0
      %p131 = por %p129, %p130
      %s133 = sadd.s32 %s132, 1
      %p136 = scmp.eq.s32.totalorder %s21, 1
      %p137 = scmp.ne.s32.totalorder %s132, %s134
      %p138 = scmp.eq.s32.totalorder %s21, 0
      %p139 = por %p137, %p138
      %p140 = scmp.ne.s32.totalorder %s132, %s134
      %p141 = scmp.eq.s32.totalorder %s26, 1
      %p142 = por %p140, %p141
      %p143 = scmp.ne.s32.totalorder %s134, %s135
      %p144 = scmp.eq.s32.totalorder %s26, 0
      %p145 = por %p143, %p144
      %p146 = scmp.ne.s32.totalorder %s134, %s135
      %p147 = scmp.eq.s32.totalorder %s27, 1
      %p148 = por %p146, %p147
      %p150 = scmp.ne.s32.totalorder %s135, %s149
      %p151 = scmp.eq.s32.totalorder %s27, 0
      %p152 = por %p150, %p151
      %s154 = sadd.s32 %s153, 1
      %p157 = scmp.eq.s32.totalorder %s21, 1
      %p158 = scmp.ne.s32.totalorder %s153, %s155
      %p159 = scmp.eq.s32.totalorder %s21, 0
      %p160 = por %p158, %p159
      %p161 = scmp.ne.s32.totalorder %s153, %s155
      %p162 = scmp.eq.s32.totalorder %s26, 1
      %p163 = por %p161, %p162
      %p164 = scmp.ne.s32.totalorder %s155, %s156
      %p165 = scmp.eq.s32.totalorder %s26, 0
      %p166 = por %p164, %p165
      %p167 = scmp.ne.s32.totalorder %s155, %s156
      %p168 = scmp.eq.s32.totalorder %s27, 1
      %p169 = por %p167, %p168
      %p171 = scmp.ne.s32.totalorder %s156, %s170
      %p172 = scmp.eq.s32.totalorder %s27, 0
      %p173 = por %p171, %p172
      %s175 = sadd.s32 %s174, 1
      %p178 = scmp.eq.s32.totalorder %s21, 1
      %p179 = scmp.ne.s32.totalorder %s174, %s176
      %p180 = scmp.eq.s32.totalorder %s21, 0
      %p181 = por %p179, %p180
      %p182 = scmp.ne.s32.totalorder %s174, %s176
      %p183 = scmp.eq.s32.totalorder %s26, 1
      %p184 = por %p182, %p183
      %p185 = scmp.ne.s32.totalorder %s176, %s177
      %p186 = scmp.eq.s32.totalorder %s26, 0
      %p187 = por %p185, %p186
      %p188 = scmp.ne.s32.totalorder %s176, %s177
      %p189 = scmp.eq.s32.totalorder %s27, 1
      %p190 = por %p188, %p189
      %p192 = scmp.ne.s32.totalorder %s177, %s191
      %p193 = scmp.eq.s32.totalorder %s27, 0
      %p194 = por %p192, %p193
      %s196 = sadd.s32 %s195, 1
      %p199 = scmp.eq.s32.totalorder %s21, 1
      %p200 = scmp.ne.s32.totalorder %s195, %s197
      %p201 = scmp.eq.s32.totalorder %s21, 0
      %p202 = por %p200, %p201
      %p203 = scmp.ne.s32.totalorder %s195, %s197
      %p204 = scmp.eq.s32.totalorder %s26, 1
      %p205 = por %p203, %p204
      %p206 = scmp.ne.s32.totalorder %s197, %s198
      %p207 = scmp.eq.s32.totalorder %s26, 0
      %p208 = por %p206, %p207
      %p209 = scmp.ne.s32.totalorder %s197, %s198
      %p210 = scmp.eq.s32.totalorder %s27, 1
      %p211 = por %p209, %p210
      %p213 = scmp.ne.s32.totalorder %s198, %s212
      %p214 = scmp.eq.s32.totalorder %s27, 0
      %p215 = por %p213, %p214
      %s217 = sadd.s32 %s216, 1
      %p220 = scmp.eq.s32.totalorder %s21, 1
      %p221 = scmp.ne.s32.totalorder %s216, %s218
      %p222 = scmp.eq.s32.totalorder %s21, 0
      %p223 = por %p221, %p222
      %p224 = scmp.ne.s32.totalorder %s216, %s218
      %p225 = scmp.eq.s32.totalorder %s26, 1
      %p226 = por %p224, %p225
      %p227 = scmp.ne.s32.totalorder %s218, %s219
      %p228 = scmp.eq.s32.totalorder %s26, 0
      %p229 = por %p227, %p228
      %p230 = scmp.ne.s32.totalorder %s218, %s219
      %p231 = scmp.eq.s32.totalorder %s27, 1
      %p232 = por %p230, %p231
      %p234 = scmp.ne.s32.totalorder %s219, %s233
      %p235 = scmp.eq.s32.totalorder %s27, 0
      %p236 = por %p234, %p235
      %s238 = sadd.s32 %s237, 1
      %p241 = scmp.eq.s32.totalorder %s21, 1
      %p242 = scmp.ne.s32.totalorder %s237, %s239
      %p243 = scmp.eq.s32.totalorder %s21, 0
      %p244 = por %p242, %p243
      %p245 = scmp.ne.s32.totalorder %s237, %s239
      %p246 = scmp.eq.s32.totalorder %s26, 1
      %p247 = por %p245, %p246
      %p248 = scmp.ne.s32.totalorder %s239, %s240
      %p249 = scmp.eq.s32.totalorder %s26, 0
      %p250 = por %p248, %p249
      %p251 = scmp.ne.s32.totalorder %s239, %s240
      %p252 = scmp.eq.s32.totalorder %s27, 1
      %p253 = por %p251, %p252
      %p255 = scmp.ne.s32.totalorder %s240, %s254
      %p256 = scmp.eq.s32.totalorder %s27, 0
      %p257 = por %p255, %p256
      %s258 = ssub.s32 %s28, %s40
      %s259 = ssub.s32 %s29, %s36
      %s260 = sor.u32 %s258, %s259
      %p261 = scmp.eq.s32.totalorder %s260, 0
      %s263 = sadd.s32 %s262, 1
      %s264 = scalar_select %p261, %s262, %s263
      %p267 = pneg %p261
      %p268 = scmp.eq.s32.totalorder %s21, 1
      %p269 = por %p267, %p268
      %p270 = scmp.ne.s32.totalorder %s262, %s265
      %p271 = scmp.eq.s32.totalorder %s21, 0
      %p272 = por %p270, %p271
      %p273 = scmp.ne.s32.totalorder %s262, %s265
      %p274 = scmp.eq.s32.totalorder %s26, 1
      %p275 = por %p273, %p274
      %p276 = scmp.ne.s32.totalorder %s265, %s266
      %p277 = scmp.eq.s32.totalorder %s26, 0
      %p278 = por %p276, %p277
      %p279 = scmp.ne.s32.totalorder %s265, %s266
      %p280 = scmp.eq.s32.totalorder %s27, 1
      %p281 = por %p279, %p280
      %p283 = scmp.ne.s32.totalorder %s266, %s282
      %p284 = scmp.eq.s32.totalorder %s27, 0
      %p285 = por %p283, %p284
      %s286 = ssub.s32 %s28, %s40
      %p287 = scmp.eq.s32.totalorder %s286, 0
      %s289 = sadd.s32 %s288, 1
      %s290 = scalar_select %p287, %s288, %s289
      %p293 = pneg %p287
      %p294 = scmp.eq.s32.totalorder %s21, 1
      %p295 = por %p293, %p294
      %p296 = scmp.ne.s32.totalorder %s288, %s291
      %p297 = scmp.eq.s32.totalorder %s21, 0
      %p298 = por %p296, %p297
      %p299 = scmp.ne.s32.totalorder %s288, %s291
      %p300 = scmp.eq.s32.totalorder %s26, 1
      %p301 = por %p299, %p300
      %p302 = scmp.ne.s32.totalorder %s291, %s292
      %p303 = scmp.eq.s32.totalorder %s26, 0
      %p304 = por %p302, %p303
      %p305 = scmp.ne.s32.totalorder %s291, %s292
      %p306 = scmp.eq.s32.totalorder %s27, 1
      %p307 = por %p305, %p306
      %p309 = scmp.ne.s32.totalorder %s292, %s308
      %p310 = scmp.eq.s32.totalorder %s27, 0
      %p311 = por %p309, %p310
      %p312 = scmp.le.s32.totalorder 1, %s21
      %p313 = scmp.lt.s32.totalorder %s21, 3
      %p314 = pnand %p312, %p313
      %p315 = pneg %p314
      // Predicated region
      $region9: #{tpu_custom_call.1} parent=5 // pred_check
        _
      $region10: #{tpu_custom_call.1} parent=5 // pred_check_branch
        %317 = sbr.rel (%p314) target = $region12
      $region11: #{tpu_custom_call.1} parent=5 // pred_region
        %s318 = ssub.s32 %s21, 1
        // Predicated region
        $region13: #{tpu_custom_call.1} parent=11 // pred_check
          %p319 = pneg %p82
        $region14: #{tpu_custom_call.1} parent=11 // pred_check_branch
          %321 = sbr.rel (%p319) target = $region16
        $region15: #{tpu_custom_call.1} parent=11 // pred_region
          _
        $region16: #{tpu_custom_call.1} parent=11 // pred_fallthru
          _
        // Predicated region
        $region17: #{tpu_custom_call.1} parent=11 // pred_check
          %p322 = pneg %p103
        $region18: #{tpu_custom_call.1} parent=11 // pred_check_branch
          %324 = sbr.rel (%p322) target = $region20
        $region19: #{tpu_custom_call.1} parent=11 // pred_region
          _
        $region20: #{tpu_custom_call.1} parent=11 // pred_fallthru
          _
        // Predicated region
        $region21: #{tpu_custom_call.1} parent=11 // pred_check
          %p325 = pneg %p124
        $region22: #{tpu_custom_call.1} parent=11 // pred_check_branch
          %327 = sbr.rel (%p325) target = $region24
        $region23: #{tpu_custom_call.1} parent=11 // pred_region
          _
        $region24: #{tpu_custom_call.1} parent=11 // pred_fallthru
          _
        // Predicated region
        $region25: #{tpu_custom_call.1} parent=11 // pred_check
          %p328 = pneg %p145
        $region26: #{tpu_custom_call.1} parent=11 // pred_check_branch
          %330 = sbr.rel (%p328) target = $region28
        $region27: #{tpu_custom_call.1} parent=11 // pred_region
          _
        $region28: #{tpu_custom_call.1} parent=11 // pred_fallthru
          _
        // Predicated region
        $region29: #{tpu_custom_call.1} parent=11 // pred_check
          %p331 = pneg %p166
        $region30: #{tpu_custom_call.1} parent=11 // pred_check_branch
          %333 = sbr.rel (%p331) target = $region32
        $region31: #{tpu_custom_call.1} parent=11 // pred_region
          _
        $region32: #{tpu_custom_call.1} parent=11 // pred_fallthru
          _
        // Predicated region
        $region33: #{tpu_custom_call.1} parent=11 // pred_check
          %p334 = pneg %p187
        $region34: #{tpu_custom_call.1} parent=11 // pred_check_branch
          %336 = sbr.rel (%p334) target = $region36
        $region35: #{tpu_custom_call.1} parent=11 // pred_region
          _
        $region36: #{tpu_custom_call.1} parent=11 // pred_fallthru
          _
        // Predicated region
        $region37: #{tpu_custom_call.1} parent=11 // pred_check
          %p337 = pneg %p208
        $region38: #{tpu_custom_call.1} parent=11 // pred_check_branch
          %339 = sbr.rel (%p337) target = $region40
        $region39: #{tpu_custom_call.1} parent=11 // pred_region
          _
        $region40: #{tpu_custom_call.1} parent=11 // pred_fallthru
          _
        // Predicated region
        $region41: #{tpu_custom_call.1} parent=11 // pred_check
          %p340 = pneg %p229
        $region42: #{tpu_custom_call.1} parent=11 // pred_check_branch
          %342 = sbr.rel (%p340) target = $region44
        $region43: #{tpu_custom_call.1} parent=11 // pred_region
          _
        $region44: #{tpu_custom_call.1} parent=11 // pred_fallthru
          _
        // Predicated region
        $region45: #{tpu_custom_call.1} parent=11 // pred_check
          %p343 = pneg %p250
        $region46: #{tpu_custom_call.1} parent=11 // pred_check_branch
          %345 = sbr.rel (%p343) target = $region48
        $region47: #{tpu_custom_call.1} parent=11 // pred_region
          _
        $region48: #{tpu_custom_call.1} parent=11 // pred_fallthru
          _
      $region12: #{tpu_custom_call.1} parent=5 // pred_fallthru
        _
      %p346 = scmp.lt.s32.totalorder %s21, 2
      // Predicated region
      $region49: #{tpu_custom_call.1} parent=5 // pred_check
        %p347 = pneg %p346
      $region50: #{tpu_custom_call.1} parent=5 // pred_check_branch
        %349 = sbr.rel (%p347) target = $region52
      $region51: #{tpu_custom_call.1} parent=5 // pred_region
        // Predicated region
        $region53: #{tpu_custom_call.1} parent=51 // pred_check
          %p350 = pneg %p55
        $region54: #{tpu_custom_call.1} parent=51 // pred_check_branch
          %352 = sbr.rel (%p350) target = $region56
        $region55: #{tpu_custom_call.1} parent=51 // pred_region
          %p353 = scmp.lt.s32.totalorder %s28, 1
          %s354 = scalar_select %p353, %s28, 1
          %p355 = scmp.lt.s32.totalorder %s29, 0
          %s356 = scalar_select %p355, %s29, 0
          %s357 = sadd.s32 %s356, %s354
          %s358 = smul.addr %s357, 4
          %s359 = scalar_lea.vmem %s0, %s358
        $region56: #{tpu_custom_call.1} parent=51 // pred_fallthru
          _
      $region52: #{tpu_custom_call.1} parent=5 // pred_fallthru
        _
      %p360 = scmp.le.s32.totalorder 1, %s21
      %p361 = scmp.lt.s32.totalorder %s21, 3
      %p362 = pnand %p360, %p361
      %p363 = pneg %p362
      // Predicated region
      $region57: #{tpu_custom_call.1} parent=5 // pred_check
        _
      $region58: #{tpu_custom_call.1} parent=5 // pred_check_branch
        %365 = sbr.rel (%p362) target = $region60
      $region59: #{tpu_custom_call.1} parent=5 // pred_region
        %s366 = ssub.s32 %s21, 1
        %p367 = scmp.lt.s32.totalorder %s30, 1
        %s368 = scalar_select %p367, %s30, 1
        %p369 = scmp.lt.s32.totalorder %s31, 0
        %s370 = scalar_select %p369, %s31, 0
        %s371 = sadd.s32 %s370, %s368
        %s372 = smul.addr %s371, 4
        %s373 = scalar_lea.vmem %s0, %s372
        %p374 = pneg %p61
        %p375 = pneg %p58
        %p376 = pneg %p82
        %p377 = pneg %p79
        %p378 = pneg %p103
        %p379 = pneg %p100
        %p380 = pneg %p124
        %p381 = pneg %p121
        %p382 = pneg %p145
        %p383 = pneg %p142
        %p384 = pneg %p166
        %p385 = pneg %p163
        %p386 = pneg %p187
        %p387 = pneg %p184
        %p388 = pneg %p208
        %p389 = pneg %p205
        %p390 = pneg %p229
        %p391 = pneg %p226
        %p392 = pneg %p250
        %p393 = pneg %p247
        %p394 = pneg %p278
        %p395 = pneg %p275
        %s396 = sand.u32 %s265, 1
        %s397 = scalar_lea.sflag [#allocation4], %s396
        %s398 = sand.u32 %s265, 1
        %s399 = smul.addr %s398, 16
        %s400 = scalar_lea.vmem [#allocation3], %s399
        %p401 = pneg %p304
        %p402 = pneg %p301
        %p403 = scmp.lt.s32.totalorder %s30, 1
        %s404 = scalar_select %p403, %s30, 1
        %s405 = smul.addr %s404, 2
        %s406 = smul.addr %s405, 8
        %s407 = scalar_lea.vmem %s11, %s406
        %p408 = scmp.lt.s32.totalorder %s30, 1
        %s409 = scalar_select %p408, %s30, 1
        %p410 = scmp.lt.s32.totalorder %s31, 0
        %s411 = scalar_select %p410, %s31, 0
        %s412 = sadd.s32 %s411, %s409
        %s413 = smul.addr %s412, 4
        %s414 = scalar_lea.vmem %s0, %s413
        %p415 = scmp.lt.s32.totalorder %s30, 1
        %s416 = scalar_select %p415, %s30, 1
        %s417 = smul.addr %s416, 2
        %s418 = smul.addr %s417, 8
        %s419 = scalar_lea.vmem %s11, %s418
        %v421 = vld [vmem:[%s414] sm:$0xf]
        %v422 = vpack.c.bf16 %v421, %v421
        %v423 = vld [vmem:[%s2] sm:$0xf]
        %v424 = vld [vmem:[%s2 + $0x4] sm:$0xf]
        %v425 = vld [vmem:[%s2 + $0x8] sm:$0xf]
        %v426 = vld [vmem:[%s2 + $0xc] sm:$0xf]
        %v427 = vld [vmem:[%s3] sm:$0xff]
        %v428 = vld [vmem:[%s3 + $0x8] sm:$0xff]
        %v429 = vld [vmem:[%s3 + $0x10] sm:$0xff]
        %v430 = vld [vmem:[%s3 + $0x18] sm:$0xff]
        %432 = vset.pattern.permute.xlu0 0
        %433 = vperm.xlu0 %432, %v427
        %v434 = vpop.permute.xlu0 %433
        %437 = vset.pattern.permute.xlu0 0
        %438 = vperm.xlu0 %437, %v428
        %v439 = vpop.permute.xlu0 %438
        %442 = vset.pattern.permute.xlu0 0
        %443 = vperm.xlu0 %442, %v429
        %v444 = vpop.permute.xlu0 %443
        %447 = vset.pattern.permute.xlu0 0
        %448 = vperm.xlu0 %447, %v430
        %v449 = vpop.permute.xlu0 %448
        %v455 = vunpack.c.l.b16 %v423
        %v456 = vunpack.c.l.b16 %v424
        %v457 = vunpack.c.l.b16 %v425
        %v458 = vunpack.c.l.b16 %v426
        %v459 = vpack.c.b16 %v456, %v455
        %v460 = vpack.c.b16 %v458, %v457
        %vm461 = vcmask 31744
        %v463 = vsel %vm461, %v459, 0
        %v466 = vsel %vm461, %v460, 0
        %vm468 = vcmask 1041408
        %v470 = vsel %vm468, %v422, 0
        %472 = vmatprep.subr.bf16.mxu0 0
        %473 = vmatpush1.bf16.msra.mxu0 %v470
        %474 = vmatprep.subr.bf16.mxu0 0
        %475 = vmatpush1.bf16.msra.mxu0 0
        %476 = vmatprep.subr.bf16.mxu0 0
        %477 = vmatpush1.bf16.msra.mxu0 0
        %478 = vmatprep.subr.bf16.mxu0 0
        %479 = vmatpush1.bf16.msra.mxu0 0
        %480 = vmatprep.subr.bf16.mxu0 0
        %481 = vmatpush1.bf16.msra.mxu0 0
        %482 = vmatprep.subr.bf16.mxu0 0
        %483 = vmatpush1.bf16.msra.mxu0 0
        %484 = vmatprep.subr.bf16.mxu0 0
        %485 = vmatpush1.bf16.msra.mxu0 0
        %486 = vmatprep.subr.bf16.mxu0 0
        %487 = vmatpush1.bf16.msra.mxu0 0
        %488 = vmatprep.subr.bf16.mxu0 0
        %489 = vmatpush1.bf16.msra.mxu0 0
        %490 = vmatprep.subr.bf16.mxu0 0
        %491 = vmatpush1.bf16.msra.mxu0 0
        %492 = vmatprep.subr.bf16.mxu0 0
        %493 = vmatpush1.bf16.msra.mxu0 0
        %494 = vmatprep.subr.bf16.mxu0 0
        %495 = vmatpush1.bf16.msra.mxu0 0
        %496 = vmatprep.subr.bf16.mxu0 0
        %497 = vmatpush1.bf16.msra.mxu0 0
        %498 = vmatprep.subr.bf16.mxu0 0
        %499 = vmatpush1.bf16.msra.mxu0 0
        %500 = vmatprep.subr.bf16.mxu0 0
        %501 = vmatpush1.bf16.msra.mxu0 0
        %502 = vmatprep.subr.bf16.mxu0 0
        %503 = vmatpush1.bf16.msra.mxu0 0
        %504 = vmatprep.mubr.bf16.mxu0 0
        %505 = vmatmul.mubr.bf16.gmra.mrb[0].mxu0 %v463
        %v506 = vpop.f32.mrb[0].mxu0
        %v507 = vadd.f32 %v434, %v506
        %v508 = vpop.f32.mrb[0].mxu0
        %v509 = vpop.f32.mrb[0].mxu0
        %v510 = vadd.f32 %v439, %v509
        %v511 = vpop.f32.mrb[0].mxu0
        %512 = vmatprep.mubr.bf16.mxu0 0
        %513 = vmatmul.mubr.bf16.gmra.mrb[0].mxu0 %v466
        %v514 = vpop.f32.mrb[0].mxu0
        %v515 = vadd.f32 %v444, %v514
        %v516 = vpop.f32.mrb[0].mxu0
        %v517 = vpop.f32.mrb[0].mxu0
        %v518 = vadd.f32 %v449, %v517
        %v519 = vpop.f32.mrb[0].mxu0
        %520 = vdwg.mxu0
        %v521 = vmax.f32 %v507, 0.0
        %v522 = vmax.f32 %v510, 0.0
        %v523 = vmax.f32 %v515, 0.0
        %v524 = vmax.f32 %v518, 0.0
        %v525 = vpack.c.bf16 %v522, %v521
        %v526 = vpack.c.bf16 %v524, %v523
        %v527 = vld [vmem:[%s4] sm:$0xf]
        %v528 = vld [vmem:[%s4 + $0x4] sm:$0xf]
        %v529 = vld [vmem:[%s4 + $0x8] sm:$0xf]
        %v530 = vld [vmem:[%s4 + $0xc] sm:$0xf]
        %v531 = vld [vmem:[%s5] sm:$0xff]
        %v532 = vld [vmem:[%s5 + $0x8] sm:$0xff]
        %v533 = vld [vmem:[%s5 + $0x10] sm:$0xff]
        %v534 = vld [vmem:[%s5 + $0x18] sm:$0xff]
        %536 = vset.pattern.permute.xlu0 0
        %537 = vperm.xlu0 %536, %v531
        %v538 = vpop.permute.xlu0 %537
        %541 = vset.pattern.permute.xlu0 0
        %542 = vperm.xlu0 %541, %v532
        %v543 = vpop.permute.xlu0 %542
        %546 = vset.pattern.permute.xlu0 0
        %547 = vperm.xlu0 %546, %v533
        %v548 = vpop.permute.xlu0 %547
        %551 = vset.pattern.permute.xlu0 0
        %552 = vperm.xlu0 %551, %v534
        %v553 = vpop.permute.xlu0 %552
        %v559 = vunpack.c.l.b16 %v527
        %v560 = vunpack.c.l.b16 %v528
        %v561 = vunpack.c.l.b16 %v529
        %v562 = vunpack.c.l.b16 %v530
        %v563 = vpack.c.b16 %v560, %v559
        %v564 = vpack.c.b16 %v562, %v561
        %vm565 = vcmask 261120
        %v567 = vsel %vm565, %v563, 0
        %v570 = vsel %vm565, %v564, 0
        %572 = vmatprep.subr.bf16.mxu0 0
        %573 = vmatpush1.bf16.msra.mxu0 %v525
        %574 = vmatprep.subr.bf16.mxu0 0
        %575 = vmatpush1.bf16.msra.mxu0 %v526
        %576 = vmatprep.subr.bf16.mxu0 0
        %577 = vmatpush1.bf16.msra.mxu0 0
        %578 = vmatprep.subr.bf16.mxu0 0
        %579 = vmatpush1.bf16.msra.mxu0 0
        %580 = vmatprep.subr.bf16.mxu0 0
        %581 = vmatpush1.bf16.msra.mxu0 0
        %582 = vmatprep.subr.bf16.mxu0 0
        %583 = vmatpush1.bf16.msra.mxu0 0
        %584 = vmatprep.subr.bf16.mxu0 0
        %585 = vmatpush1.bf16.msra.mxu0 0
        %586 = vmatprep.subr.bf16.mxu0 0
        %587 = vmatpush1.bf16.msra.mxu0 0
        %588 = vmatprep.subr.bf16.mxu0 0
        %589 = vmatpush1.bf16.msra.mxu0 0
        %590 = vmatprep.subr.bf16.mxu0 0
        %591 = vmatpush1.bf16.msra.mxu0 0
        %592 = vmatprep.subr.bf16.mxu0 0
        %593 = vmatpush1.bf16.msra.mxu0 0
        %594 = vmatprep.subr.bf16.mxu0 0
        %595 = vmatpush1.bf16.msra.mxu0 0
        %596 = vmatprep.subr.bf16.mxu0 0
        %597 = vmatpush1.bf16.msra.mxu0 0
        %598 = vmatprep.subr.bf16.mxu0 0
        %599 = vmatpush1.bf16.msra.mxu0 0
        %600 = vmatprep.subr.bf16.mxu0 0
        %601 = vmatpush1.bf16.msra.mxu0 0
        %602 = vmatprep.subr.bf16.mxu0 0
        %603 = vmatpush1.bf16.msra.mxu0 0
        %604 = vmatprep.mubr.bf16.mxu0 0
        %605 = vmatmul.mubr.bf16.gmra.mrb[0].mxu0 %v567
        %v606 = vpop.f32.mrb[0].mxu0
        %v607 = vadd.f32 %v538, %v606
        %v608 = vpop.f32.mrb[0].mxu0
        %v609 = vpop.f32.mrb[0].mxu0
        %v610 = vadd.f32 %v543, %v609
        %v611 = vpop.f32.mrb[0].mxu0
        %612 = vmatprep.mubr.bf16.mxu0 0
        %613 = vmatmul.mubr.bf16.gmra.mrb[0].mxu0 %v570
        %v614 = vpop.f32.mrb[0].mxu0
        %v615 = vadd.f32 %v548, %v614
        %v616 = vpop.f32.mrb[0].mxu0
        %v617 = vpop.f32.mrb[0].mxu0
        %v618 = vadd.f32 %v553, %v617
        %v619 = vpop.f32.mrb[0].mxu0
        %620 = vdwg.mxu0
        %v621 = vmax.f32 %v607, 0.0
        %v622 = vmax.f32 %v610, 0.0
        %v623 = vmax.f32 %v615, 0.0
        %v624 = vmax.f32 %v618, 0.0
        %v625 = vpack.c.bf16 %v622, %v621
        %v626 = vpack.c.bf16 %v624, %v623
        %v629 = vunpack.c.l.b16 %v625
        %v630 = vunpack.c.h.b16 %v625
        %v631 = vunpack.c.l.b16 %v626
        %v632 = vunpack.c.h.b16 %v626
        %v633 = vpack.c.b16 %v629, %v629
        %v634 = vpack.c.b16 %v630, %v630
        %v635 = vpack.c.b16 %v631, %v631
        %v636 = vpack.c.b16 %v632, %v632
        %641 = vst [vmem:[%s400] sm:$0xf] %v633
        %642 = vst [vmem:[%s400 + $0x4] sm:$0xf] %v634
        %643 = vst [vmem:[%s400 + $0x8] sm:$0xf] %v635
        %644 = vst [vmem:[%s400 + $0xc] sm:$0xf] %v636
        %p645 = scmp.eq.s32.totalorder %s31, 0
        // Predicated region
        $region61: #{tpu_custom_call.1} parent=59 // pred_check
          %p646 = pneg %p645
        $region62: #{tpu_custom_call.1} parent=59 // pred_check_branch
          %648 = sbr.rel (%p646) target = $region64
        $region63: #{tpu_custom_call.1} parent=59 // pred_region
          %vm649 = vcmask 64512
          %650 = vst.msk [vmem:[#allocation2] sm:$0xff] %vm649, 0.0
          %651 = vst.msk [vmem:[#allocation2 + $0x8] sm:$0xff] %vm649, 0.0
          %652 = vst.msk [vmem:[#allocation2 + $0x10] sm:$0xff] %vm649, 0.0
          %653 = vst.msk [vmem:[#allocation2 + $0x18] sm:$0xff] %vm649, 0.0
        $region64: #{tpu_custom_call.1} parent=59 // pred_fallthru
          _
        %v654 = vld [vmem:[#allocation2] sm:$0xff]
        %v655 = vld [vmem:[#allocation2 + $0x8] sm:$0xff]
        %v656 = vld [vmem:[#allocation2 + $0x10] sm:$0xff]
        %v657 = vld [vmem:[#allocation2 + $0x18] sm:$0xff]
        %v658 = vld [vmem:[%s1] sm:$0xf]
        %v659 = vld [vmem:[%s1 + $0x4] sm:$0xf]
        %v660 = vld [vmem:[%s1 + $0x8] sm:$0xf]
        %v661 = vld [vmem:[%s1 + $0xc] sm:$0xf]
        %v662 = vld [vmem:[%s1 + $0x10] sm:$0xf]
        %v663 = vld [vmem:[%s1 + $0x14] sm:$0xf]
        %v664 = vld [vmem:[%s1 + $0x18] sm:$0xf]
        %v665 = vld [vmem:[%s1 + $0x1c] sm:$0xf]
        %v666 = vld [vmem:[%s1 + $0x20] sm:$0xf]
        %v667 = vld [vmem:[%s1 + $0x24] sm:$0xf]
        %v668 = vld [vmem:[%s1 + $0x28] sm:$0xf]
        %v669 = vld [vmem:[%s1 + $0x2c] sm:$0xf]
        %v670 = vld [vmem:[%s1 + $0x30] sm:$0xf]
        %v671 = vld [vmem:[%s1 + $0x34] sm:$0xf]
        %v672 = vld [vmem:[%s1 + $0x38] sm:$0xf]
        %v673 = vld [vmem:[%s1 + $0x3c] sm:$0xf]
        %v690 = vunpack.c.l.b16 %v658
        %v691 = vunpack.c.l.b16 %v659
        %v692 = vunpack.c.l.b16 %v660
        %v693 = vunpack.c.l.b16 %v661
        %v694 = vunpack.c.l.b16 %v662
        %v695 = vunpack.c.l.b16 %v663
        %v696 = vunpack.c.l.b16 %v664
        %v697 = vunpack.c.l.b16 %v665
        %v698 = vunpack.c.l.b16 %v666
        %v699 = vunpack.c.l.b16 %v667
        %v700 = vunpack.c.l.b16 %v668
        %v701 = vunpack.c.l.b16 %v669
        %v702 = vunpack.c.l.b16 %v670
        %v703 = vunpack.c.l.b16 %v671
        %v704 = vunpack.c.l.b16 %v672
        %v705 = vunpack.c.l.b16 %v673
        %v706 = vpack.c.b16 %v691, %v690
        %v707 = vpack.c.b16 %v693, %v692
        %v708 = vpack.c.b16 %v695, %v694
        %v709 = vpack.c.b16 %v697, %v696
        %v710 = vpack.c.b16 %v699, %v698
        %v711 = vpack.c.b16 %v701, %v700
        %v712 = vpack.c.b16 %v703, %v702
        %v713 = vpack.c.b16 %v705, %v704
        %722 = vmatprep.subr.bf16.mxu0 0
        %723 = vmatpush1.bf16.msra.mxu0 %v706
        %724 = vmatprep.subr.bf16.mxu0 0
        %725 = vmatpush1.bf16.msra.mxu0 %v707
        %726 = vmatprep.subr.bf16.mxu0 0
        %727 = vmatpush1.bf16.msra.mxu0 %v708
        %728 = vmatprep.subr.bf16.mxu0 0
        %729 = vmatpush1.bf16.msra.mxu0 %v709
        %730 = vmatprep.subr.bf16.mxu0 0
        %731 = vmatpush1.bf16.msra.mxu0 %v710
        %732 = vmatprep.subr.bf16.mxu0 0
        %733 = vmatpush1.bf16.msra.mxu0 %v711
        %734 = vmatprep.subr.bf16.mxu0 0
        %735 = vmatpush1.bf16.msra.mxu0 %v712
        %736 = vmatprep.subr.bf16.mxu0 0
        %737 = vmatpush1.bf16.msra.mxu0 %v713
        %738 = vmatprep.subr.bf16.mxu0 0
        %739 = vmatpush1.bf16.msra.mxu0 0
        %740 = vmatprep.subr.bf16.mxu0 0
        %741 = vmatpush1.bf16.msra.mxu0 0
        %742 = vmatprep.subr.bf16.mxu0 0
        %743 = vmatpush1.bf16.msra.mxu0 0
        %744 = vmatprep.subr.bf16.mxu0 0
        %745 = vmatpush1.bf16.msra.mxu0 0
        %746 = vmatprep.subr.bf16.mxu0 0
        %747 = vmatpush1.bf16.msra.mxu0 0
        %748 = vmatprep.subr.bf16.mxu0 0
        %749 = vmatpush1.bf16.msra.mxu0 0
        %750 = vmatprep.subr.bf16.mxu0 0
        %751 = vmatpush1.bf16.msra.mxu0 0
        %752 = vmatprep.subr.bf16.mxu0 0
        %753 = vmatpush1.bf16.msra.mxu0 0
        %754 = vmatprep.mubr.bf16.mxu0 0
        %755 = vmatmul.mubr.bf16.gmra.mrb[0].mxu0 %v625
        %v756 = vpop.f32.mrb[0].mxu0
        %v757 = vadd.f32 0.0, %v756
        %v758 = vpop.f32.mrb[0].mxu0
        %v759 = vpop.f32.mrb[0].mxu0
        %v760 = vadd.f32 0.0, %v759
        %v761 = vpop.f32.mrb[0].mxu0
        %762 = vmatprep.mubr.bf16.mxu0 0
        %763 = vmatmul.mubr.bf16.gmra.mrb[0].mxu0 %v626
        %v764 = vpop.f32.mrb[0].mxu0
        %v765 = vadd.f32 0.0, %v764
        %v766 = vpop.f32.mrb[0].mxu0
        %v767 = vpop.f32.mrb[0].mxu0
        %v768 = vadd.f32 0.0, %v767
        %v769 = vpop.f32.mrb[0].mxu0
        %770 = vdwg.mxu0
        %v771 = vadd.f32 %v654, %v757
        %v772 = vadd.f32 %v655, %v760
        %v773 = vadd.f32 %v656, %v765
        %v774 = vadd.f32 %v657, %v768
        %vm775 = vcmask 64512
        %776 = vst.msk [vmem:[#allocation2] sm:$0xff] %vm775, %v771
        %777 = vst.msk [vmem:[#allocation2 + $0x8] sm:$0xff] %vm775, %v772
        %778 = vst.msk [vmem:[#allocation2 + $0x10] sm:$0xff] %vm775, %v773
        %779 = vst.msk [vmem:[#allocation2 + $0x18] sm:$0xff] %vm775, %v774
        // Predicated region
        $region65: #{tpu_custom_call.1} parent=59 // pred_check
          %p780 = pneg %p645
        $region66: #{tpu_custom_call.1} parent=59 // pred_check_branch
          %782 = sbr.rel (%p780) target = $region68
        $region67: #{tpu_custom_call.1} parent=59 // pred_region
          %v783 = vld [vmem:[#allocation2] sm:$0xff]
          %v784 = vld [vmem:[#allocation2 + $0x8] sm:$0xff]
          %v785 = vld [vmem:[#allocation2 + $0x10] sm:$0xff]
          %v786 = vld [vmem:[#allocation2 + $0x18] sm:$0xff]
          %v787 = vmul.f32 %v783, 0.0625
          %v788 = vmul.f32 %v784, 0.0625
          %v789 = vmul.f32 %v785, 0.0625
          %v790 = vmul.f32 %v786, 0.0625
          %v791 = vsel %vm775, %v787, -inf
          %792 = vmax.xlane.f32.xlu0 %v791
          %v793 = vpop.xlane.xlu0 %792
          %v794 = vsel %vm775, %v788, -inf
          %795 = vmax.xlane.f32.xlu0 %v794
          %v796 = vpop.xlane.xlu0 %795
          %v797 = vsel %vm775, %v789, -inf
          %798 = vmax.xlane.f32.xlu0 %v797
          %v799 = vpop.xlane.xlu0 %798
          %v800 = vsel %vm775, %v790, -inf
          %801 = vmax.xlane.f32.xlu0 %v800
          %v802 = vpop.xlane.xlu0 %801
          %v803 = vld [vmem:[%s6] sm:$0xff]
          %v804 = vld [vmem:[%s6 + $0x8] sm:$0xff]
          %v805 = vld [vmem:[%s6 + $0x10] sm:$0xff]
          %v806 = vld [vmem:[%s6 + $0x18] sm:$0xff]
          %v807 = vld [vmem:[%s7] sm:$0xff]
          %v808 = vld [vmem:[%s7 + $0x8] sm:$0xff]
          %v809 = vld [vmem:[%s7 + $0x10] sm:$0xff]
          %v810 = vld [vmem:[%s7 + $0x18] sm:$0xff]
          %v812 = vsel %vm565, %v803, 0
          %v815 = vsel %vm565, %v804, 0
          %v818 = vsel %vm565, %v805, 0
          %v821 = vsel %vm565, %v806, 0
          %823 = vmatprep.subr.mxu0 0.0
          %824 = vmatpush1.msra.mxu0 %v793
          %825 = vmatprep.subr.mxu0 0.0
          %826 = vmatpush1.msra.mxu0 %v796
          %827 = vmatprep.subr.mxu0 0.0
          %828 = vmatpush1.msra.mxu0 %v799
          %829 = vmatprep.subr.mxu0 0.0
          %830 = vmatpush1.msra.mxu0 %v802
          %831 = vmatprep.subr.mxu0 0.0
          %832 = vmatpush1.msra.mxu0 0.0
          %833 = vmatprep.subr.mxu0 0.0
          %834 = vmatpush1.msra.mxu0 0.0
          %835 = vmatprep.subr.mxu0 0.0
          %836 = vmatpush1.msra.mxu0 0.0
          %837 = vmatprep.subr.mxu0 0.0
          %838 = vmatpush1.msra.mxu0 0.0
          %839 = vmatprep.subr.mxu0 0.0
          %840 = vmatpush1.msra.mxu0 0.0
          %841 = vmatprep.subr.mxu0 0.0
          %842 = vmatpush1.msra.mxu0 0.0
          %843 = vmatprep.subr.mxu0 0.0
          %844 = vmatpush1.msra.mxu0 0.0
          %845 = vmatprep.subr.mxu0 0.0
          %846 = vmatpush1.msra.mxu0 0.0
          %847 = vmatprep.subr.mxu0 0.0
          %848 = vmatpush1.msra.mxu0 0.0
          %849 = vmatprep.subr.mxu0 0.0
          %850 = vmatpush1.msra.mxu0 0.0
          %851 = vmatprep.subr.mxu0 0.0
          %852 = vmatpush1.msra.mxu0 0.0
          %853 = vmatprep.subr.mxu0 0.0
          %854 = vmatpush1.msra.mxu0 0.0
          %855 = vmatprep.subr.mxu0 0.0
          %856 = vmatpush1.msra.mxu0 0.0
          %857 = vmatprep.subr.mxu0 0.0
          %858 = vmatpush1.msra.mxu0 0.0
          %859 = vmatprep.subr.mxu0 0.0
          %860 = vmatpush1.msra.mxu0 0.0
          %861 = vmatprep.subr.mxu0 0.0
          %862 = vmatpush1.msra.mxu0 0.0
          %863 = vmatprep.subr.mxu0 0.0
          %864 = vmatpush1.msra.mxu0 0.0
          %865 = vmatprep.subr.mxu0 0.0
          %866 = vmatpush1.msra.mxu0 0.0
          %867 = vmatprep.subr.mxu0 0.0
          %868 = vmatpush1.msra.mxu0 0.0
          %869 = vmatprep.subr.mxu0 0.0
          %870 = vmatpush1.msra.mxu0 0.0
          %871 = vmatprep.subr.mxu0 0.0
          %872 = vmatpush1.msra.mxu0 0.0
          %873 = vmatprep.subr.mxu0 0.0
          %874 = vmatpush1.msra.mxu0 0.0
          %875 = vmatprep.subr.mxu0 0.0
          %876 = vmatpush1.msra.mxu0 0.0
          %877 = vmatprep.subr.mxu0 0.0
          %878 = vmatpush1.msra.mxu0 0.0
          %879 = vmatprep.subr.mxu0 0.0
          %880 = vmatpush1.msra.mxu0 0.0
          %881 = vmatprep.subr.mxu0 0.0
          %882 = vmatpush1.msra.mxu0 0.0
          %883 = vmatprep.subr.mxu0 0.0
          %884 = vmatpush1.msra.mxu0 0.0
          %885 = vmatprep.subr.mxu0 0.0
          %886 = vmatpush1.msra.mxu0 0.0
          %887 = vmatprep.mubr.f32.mxu0 0.0
          %888 = vmatmul.mubr.f32.gmra.mrb[0].mxu0 %v812
          %v889 = vpop.f32.mrb[0].mxu0
          %v890 = vadd.f32 %v807, %v889
          %v891 = vpop.f32.mrb[0].mxu0
          %892 = vmatprep.mubr.f32.mxu0 0.0
          %893 = vmatmul.mubr.f32.gmra.mrb[0].mxu0 %v815
          %v894 = vpop.f32.mrb[0].mxu0
          %v895 = vadd.f32 %v808, %v894
          %v896 = vpop.f32.mrb[0].mxu0
          %897 = vmatprep.mubr.f32.mxu0 0.0
          %898 = vmatmul.mubr.f32.gmra.mrb[0].mxu0 %v818
          %v899 = vpop.f32.mrb[0].mxu0
          %v900 = vadd.f32 %v809, %v899
          %v901 = vpop.f32.mrb[0].mxu0
          %902 = vmatprep.mubr.f32.mxu0 0.0
          %903 = vmatmul.mubr.f32.gmra.mrb[0].mxu0 %v821
          %v904 = vpop.f32.mrb[0].mxu0
          %v905 = vadd.f32 %v810, %v904
          %v906 = vpop.f32.mrb[0].mxu0
          %907 = vdwg.mxu0
          %v908 = vmax.f32 %v890, 0.0
          %v909 = vmax.f32 %v895, 0.0
          %v910 = vmax.f32 %v900, 0.0
          %v911 = vmax.f32 %v905, 0.0
          %v912 = vld [vmem:[%s8] sm:$0xff]
          %v913 = vld [vmem:[%s8 + $0x8] sm:$0x3]
          %v914 = vld [vmem:[%s9] sm:$0xff]
          %v915 = vld [vmem:[%s9 + $0x8] sm:$0x3]
          %v917 = vsel %vm565, %v912, 0
          %v920 = vsel %vm565, %v913, 0
          %922 = vmatprep.subr.mxu0 0.0
          %923 = vmatpush1.msra.mxu0 %v908
          %924 = vmatprep.subr.mxu0 0.0
          %925 = vmatpush1.msra.mxu0 %v909
          %926 = vmatprep.subr.mxu0 0.0
          %927 = vmatpush1.msra.mxu0 %v910
          %928 = vmatprep.subr.mxu0 0.0
          %929 = vmatpush1.msra.mxu0 %v911
          %930 = vmatprep.subr.mxu0 0.0
          %931 = vmatpush1.msra.mxu0 0.0
          %932 = vmatprep.subr.mxu0 0.0
          %933 = vmatpush1.msra.mxu0 0.0
          %934 = vmatprep.subr.mxu0 0.0
          %935 = vmatpush1.msra.mxu0 0.0
          %936 = vmatprep.subr.mxu0 0.0
          %937 = vmatpush1.msra.mxu0 0.0
          %938 = vmatprep.subr.mxu0 0.0
          %939 = vmatpush1.msra.mxu0 0.0
          %940 = vmatprep.subr.mxu0 0.0
          %941 = vmatpush1.msra.mxu0 0.0
          %942 = vmatprep.subr.mxu0 0.0
          %943 = vmatpush1.msra.mxu0 0.0
          %944 = vmatprep.subr.mxu0 0.0
          %945 = vmatpush1.msra.mxu0 0.0
          %946 = vmatprep.subr.mxu0 0.0
          %947 = vmatpush1.msra.mxu0 0.0
          %948 = vmatprep.subr.mxu0 0.0
          %949 = vmatpush1.msra.mxu0 0.0
          %950 = vmatprep.subr.mxu0 0.0
          %951 = vmatpush1.msra.mxu0 0.0
          %952 = vmatprep.subr.mxu0 0.0
          %953 = vmatpush1.msra.mxu0 0.0
          %954 = vmatprep.subr.mxu0 0.0
          %955 = vmatpush1.msra.mxu0 0.0
          %956 = vmatprep.subr.mxu0 0.0
          %957 = vmatpush1.msra.mxu0 0.0
          %958 = vmatprep.subr.mxu0 0.0
          %959 = vmatpush1.msra.mxu0 0.0
          %960 = vmatprep.subr.mxu0 0.0
          %961 = vmatpush1.msra.mxu0 0.0
          %962 = vmatprep.subr.mxu0 0.0
          %963 = vmatpush1.msra.mxu0 0.0
          %964 = vmatprep.subr.mxu0 0.0
          %965 = vmatpush1.msra.mxu0 0.0
          %966 = vmatprep.subr.mxu0 0.0
          %967 = vmatpush1.msra.mxu0 0.0
          %968 = vmatprep.subr.mxu0 0.0
          %969 = vmatpush1.msra.mxu0 0.0
          %970 = vmatprep.subr.mxu0 0.0
          %971 = vmatpush1.msra.mxu0 0.0
          %972 = vmatprep.subr.mxu0 0.0
          %973 = vmatpush1.msra.mxu0 0.0
          %974 = vmatprep.subr.mxu0 0.0
          %975 = vmatpush1.msra.mxu0 0.0
          %976 = vmatprep.subr.mxu0 0.0
          %977 = vmatpush1.msra.mxu0 0.0
          %978 = vmatprep.subr.mxu0 0.0
          %979 = vmatpush1.msra.mxu0 0.0
          %980 = vmatprep.subr.mxu0 0.0
          %981 = vmatpush1.msra.mxu0 0.0
          %982 = vmatprep.subr.mxu0 0.0
          %983 = vmatpush1.msra.mxu0 0.0
          %984 = vmatprep.subr.mxu0 0.0
          %985 = vmatpush1.msra.mxu0 0.0
          %986 = vmatprep.mubr.f32.mxu0 0.0
          %987 = vmatmul.mubr.f32.gmra.mrb[0].mxu0 %v917
          %v988 = vpop.f32.mrb[0].mxu0
          %v989 = vadd.f32 %v914, %v988
          %v990 = vpop.f32.mrb[0].mxu0
          %991 = vmatprep.mubr.f32.mxu0 0.0
          %992 = vmatmul.mubr.f32.gmra.mrb[0].mxu0 %v920
          %v993 = vpop.f32.mrb[0].mxu0
          %v994 = vadd.f32 %v915, %v993
          %v995 = vpop.f32.mrb[0].mxu0
          %996 = vdwg.mxu0
          %vm997 = vcmask 7168
          %998 = vst.msk [vmem:[%s419] sm:$0xff] %vm997, %v989
          %vm999 = vcmask 1024
          %1000 = vst.msk [vmem:[%s419 + $0x8] sm:$0x3] %vm999, %v994
        $region68: #{tpu_custom_call.1} parent=59 // pred_fallthru
          _
        %s1001 = sand.u32 %s265, 1
        %s1002 = scalar_lea.sflag [#allocation4], %s1001
        %s1003 = sand.u32 %s265, 1
        %s1004 = smul.addr %s1003, 16
        %s1005 = scalar_lea.vmem [#allocation3], %s1004
        %p1006 = scmp.lt.s32.totalorder %s30, 1
        %s1007 = scalar_select %p1006, %s30, 1
        %s1008 = smul.addr %s1007, 2
        %s1009 = smul.addr %s1008, 8
        %s1010 = scalar_lea.vmem %s11, %s1009
        // Predicated region
        $region69: #{tpu_custom_call.1} parent=59 // pred_check
          %p1011 = pneg %p275
        $region70: #{tpu_custom_call.1} parent=59 // pred_check_branch
          %1013 = sbr.rel (%p1011) target = $region72
        $region71: #{tpu_custom_call.1} parent=59 // pred_region
          %s1015 = ssub.s32 256, 256
          %1016 = vsyncadd %s1002, %s1015
          %s1017 = smul.addr %s30, 4
          %s1018 = sadd.s32 %s31, %s1017
          %s1019 = smul.addr %s1018, 64
          %s1020 = scalar_lea.hbm %s10, %s1019
          %s1021 = sshll.u32 %s1005, 4
          %s1022 = int_to_ptr.vmem [resolvable:$true] %s1021
          %1027 = dma.vmem_to_hbm [thread:$0]  %s1022, 256, %s1020, %s1002, 64, 64, 4
        $region72: #{tpu_custom_call.1} parent=59 // pred_fallthru
          _
        // Predicated region
        $region73: #{tpu_custom_call.1} parent=59 // pred_check
          %p1028 = pneg %p301
        $region74: #{tpu_custom_call.1} parent=59 // pred_check_branch
          %1030 = sbr.rel (%p1028) target = $region76
        $region75: #{tpu_custom_call.1} parent=59 // pred_region
          _
        $region76: #{tpu_custom_call.1} parent=59 // pred_fallthru
          _
      $region60: #{tpu_custom_call.1} parent=5 // pred_fallthru
        _
      %p1031 = scmp.le.s32.totalorder 2, %s21
      // Predicated region
      $region77: #{tpu_custom_call.1} parent=5 // pred_check
        %p1032 = pneg %p1031
      $region78: #{tpu_custom_call.1} parent=5 // pred_check_branch
        %1034 = sbr.rel (%p1032) target = $region80
      $region79: #{tpu_custom_call.1} parent=5 // pred_region
        %s1035 = ssub.s32 %s21, 2
        // Predicated region
        $region81: #{tpu_custom_call.1} parent=79 // pred_check
          %p1036 = pneg %p281
        $region82: #{tpu_custom_call.1} parent=79 // pred_check_branch
          %1038 = sbr.rel (%p1036) target = $region84
        $region83: #{tpu_custom_call.1} parent=79 // pred_region
          %s1039 = sand.u32 %s266, 1
          %s1040 = scalar_lea.sflag [#allocation4], %s1039
          %s1041 = sand.u32 %s266, 1
          %s1042 = smul.addr %s1041, 16
          %s1043 = scalar_lea.vmem [#allocation3], %s1042
          %1044 = dma.done %s1040, 256
        $region84: #{tpu_custom_call.1} parent=79 // pred_fallthru
          _
        // Predicated region
        $region85: #{tpu_custom_call.1} parent=79 // pred_check
          %p1045 = pneg %p307
        $region86: #{tpu_custom_call.1} parent=79 // pred_check_branch
          %1047 = sbr.rel (%p1045) target = $region88
        $region87: #{tpu_custom_call.1} parent=79 // pred_region
          %p1048 = scmp.lt.s32.totalorder %s32, 1
          %s1049 = scalar_select %p1048, %s32, 1
          %s1050 = smul.addr %s1049, 2
          %s1051 = smul.addr %s1050, 8
          %s1052 = scalar_lea.vmem %s11, %s1051
        $region88: #{tpu_custom_call.1} parent=79 // pred_fallthru
          _
      $region80: #{tpu_custom_call.1} parent=5 // pred_fallthru
        _
    $region6: #{tpu_custom_call.1} parent=1 // loop_footer
      %s25 = sadd.s32 1, %s21
    $region7: #{tpu_custom_call.1} parent=1 // loop_footer_branch
      %20 = sbr.rel target = $region3
    $region8: #{tpu_custom_call.1} parent=1 // loop_exit
      _
    %1053 = vsyncpa [#allocation4], 1
    %s1054 = scalar_lea.sflag [#allocation4], 1
    %1055 = vsyncpa %s1054, 1

</llo_original>
